<compile_context>
chip_gen: v6e
topology: v6e:2x2x1
jax: 0.10.0
libtpu: 0.0.40
codegen_flags: <defaults>
</compile_context>

<pallas_src>
import jax
import jax.numpy as jnp
from jax.experimental import pallas as pl
from jax.experimental.pallas import tpu as pltpu


def _round_up(x, m):
    return ((x + m - 1) // m) * m


def _cdiv(a, b):
    return (a + b - 1) // b


def _default_pack_factor():
    """P=2 on 128-wide-MXU generations (v2-v5), P=4 on v6e/v7x (256-wide)."""
    try:
        kind = jax.devices()[0].device_kind.lower()
    except Exception:
        return 4
    if any(v in kind for v in ("v2", "v3", "v4", "v5")):
        return 2
    return 4


def _block_diag(w, p):
    """[k, n] -> [p*k, p*n] block-diagonal replication of w."""
    k, n = w.shape
    out = jnp.zeros((p * k, p * n), w.dtype)
    for i in range(p):
        out = out.at[i * k:(i + 1) * k, i * n:(i + 1) * n].set(w)
    return out


def _mlp_kernel(x_ref, lay1_ref, w2_ref, w3_ref, b23_ref, o_ref):
    kin = lay1_ref.shape[0] - 1        # P * in_dim
    hidP = w2_ref.shape[1]             # P * hidden_dim
    outP = w3_ref.shape[1]             # P * output_dim

    x = x_ref[...]                     # [TB, P*in_dim] f32

    # Layer 1: tiny contraction -> VPU broadcast FMAs against the
    # block-diagonal [w1 ; b1] slab (no MXU, no lane concat/relayout).
    h = lay1_ref[kin:kin + 1, :]       # tiled bias row, [1, P*hid]
    for k in range(kin):               # static loop; kin = P*in_dim is tiny
        h = h + x[:, k:k + 1] * lay1_ref[k:k + 1, :]
    h = jnp.maximum(h, 0.0)

    # Layers 2 & 3: MXU matmuls on P*64-lane-dense activations. Weights are
    # (by default) bf16 with f32 accumulation; bias add / ReLU stay f32.
    h = (jnp.dot(h.astype(w2_ref.dtype), w2_ref[...],
                 preferred_element_type=jnp.float32)
         + b23_ref[0:1, :hidP])
    h = jnp.maximum(h, 0.0)
    o_ref[...] = (jnp.dot(h.astype(w3_ref.dtype), w3_ref[...],
                          preferred_element_type=jnp.float32)
                  + b23_ref[1:2, :outP]).astype(o_ref.dtype)


def prepare_params(params, matmul_dtype=jnp.bfloat16, pack=None):
    """One-time, call-invariant parameter packing (hoisted out of forward).

    Builds the P-way lane-packed (block-diagonal) weights:
      lay1 : [P*in_dim + 1, P*hid]  f32   (block-diag w1, last row = tiled b1)
      w2   : [P*hid, P*hid]         matmul_dtype (block-diag)
      w3   : [P*hid, P*out_dim]     matmul_dtype (block-diag)
      b23  : [2, P*max(hid,out)]    f32   (tiled b2 / b3)

    matmul_dtype=jnp.bfloat16 (default) is MXU-native on all TPU generations;
    pass jnp.float32 for bit-exact-vs-f32 results.
    """
    P = _default_pack_factor() if pack is None else int(pack)

    w1 = jnp.asarray(params["w1"], jnp.float32)
    b1 = jnp.asarray(params["b1"], jnp.float32)
    w2 = jnp.asarray(params["w2"], jnp.float32)
    b2 = jnp.asarray(params["b2"], jnp.float32)
    w3 = jnp.asarray(params["w3"], jnp.float32)
    b3 = jnp.asarray(params["b3"], jnp.float32)

    in_dim, hid = w1.shape
    out_dim = w3.shape[1]

    lay1 = jnp.concatenate(
        [_block_diag(w1, P), jnp.tile(b1, P)[None, :]], axis=0)   # f32 VPU path

    feat = max(hid, out_dim)
    b23 = jnp.zeros((2, P * feat), jnp.float32)
    b23 = b23.at[0, :P * hid].set(jnp.tile(b2, P))
    b23 = b23.at[1, :P * out_dim].set(jnp.tile(b3, P))

    return {
        "lay1": lay1,
        "w2": _block_diag(w2, P).astype(matmul_dtype),
        "w3": _block_diag(w3, P).astype(matmul_dtype),
        "b23": b23,
    }


def threshold_encoder_forward(threshold, prepped, *, block_b=4096):
    """Forward pass of ThresholdEncoder.

    Args:
      threshold: [batch] or [batch, input_dim] float array.
      prepped: output of prepare_params().
      block_b: max batch-elements per grid step (2048-4096 recommended).
    Returns:
      [batch, output_dim] float32 array.
    """
    if threshold.ndim == 1:
        threshold = threshold[:, None]
    B, in_dim = threshold.shape
    lay1, w2, w3, b23 = prepped["lay1"], prepped["w2"], prepped["w3"], prepped["b23"]
    P = (lay1.shape[0] - 1) // in_dim          # pack factor, from packed shapes
    hidP, outP = w2.shape[1], w3.shape[1]
    out_dim = outP // P

    # Batch tiling in packed rows (each kernel row holds P batch elements).
    B_ceil = _round_up(B, P)
    rows = B_ceil // P
    block_rows = _round_up(max(block_b // P, 8), 8)
    if rows >= 16:
        # Force >= 2 grid steps so both v7x TensorCores get work.
        tb = min(block_rows, _round_up(_cdiv(rows, 2), 8))
    else:
        tb = 8
    grid = _cdiv(rows, tb)
    rows_in = grid * tb                        # pad input so block reads are in-bounds

    x = threshold.astype(jnp.float32)
    pad = rows_in * P - B                      # tiny: input is only 4*in_dim B/row
    if pad:
        x = jnp.pad(x, ((0, pad), (0, 0)))
    x = x.reshape(rows_in, P * in_dim)         # lane-pack P batch rows per kernel row

    cost = pl.CostEstimate(
        flops=2 * rows * (P * in_dim * hidP + hidP * hidP + hidP * outP),
        transcendentals=0,
        bytes_accessed=int(x.size * 4 + rows * outP * 4
                           + (lay1.size + b23.size) * 4
                           + (w2.size + w3.size) * w2.dtype.itemsize),
    )

    out_packed = pl.pallas_call(
        _mlp_kernel,
        out_shape=jax.ShapeDtypeStruct((rows, outP), jnp.float32),
        grid=(grid,),
        in_specs=[
            pl.BlockSpec((tb, P * in_dim), lambda i: (i, 0)),   # x: tiled over batch
            pl.BlockSpec(lay1.shape, lambda i: (0, 0)),         # VMEM-resident params
            pl.BlockSpec(w2.shape, lambda i: (0, 0)),
            pl.BlockSpec(w3.shape, lambda i: (0, 0)),
            pl.BlockSpec(b23.shape, lambda i: (0, 0)),
        ],
        out_specs=pl.BlockSpec((tb, outP), lambda i: (i, 0)),   # last block write-clipped
        compiler_params=pltpu.CompilerParams(
            dimension_semantics=("parallel",)),
        cost_estimate=cost,
    )(x, lay1, w2, w3, b23)

    # Row-major unpack: [rows, P*out_dim] -> [B_ceil, out_dim] (bit-identical).
    out = out_packed.reshape(rows * P, out_dim)
    if rows * P != B:                          # only when B % P != 0
        out = out[:B]
    return out


def init_params(key, input_dim=1, hidden_dim=64, output_dim=64):
    """Deterministic synthetic parameter init (Kaiming-uniform-ish scale)."""
    k1, k2, k3, k4, k5, k6 = jax.random.split(key, 6)

    def lin(kw, kb, fan_in, fan_out):
        bound = 1.0 / jnp.sqrt(fan_in)
        w = jax.random.uniform(kw, (fan_in, fan_out), jnp.float32, -bound, bound)
        b = jax.random.uniform(kb, (fan_out,), jnp.float32, -bound, bound)
        return w, b

    w1, b1 = lin(k1, k2, input_dim, hidden_dim)
    w2, b2 = lin(k3, k4, hidden_dim, hidden_dim)
    w3, b3 = lin(k5, k6, hidden_dim, output_dim)
    return {"w1": w1, "b1": b1, "w2": w2, "b2": b2, "w3": w3, "b3": b3}


if __name__ == "__main__":
    key = jax.random.PRNGKey(0)
    pkey, xkey = jax.random.split(key)

    input_dim, hidden_dim, output_dim = 1, 64, 64
    params = init_params(pkey, input_dim, hidden_dim, output_dim)

    def ref_fn(x, p):
        h = jnp.maximum(x @ p["w1"] + p["b1"], 0.0)
        h = jnp.maximum(h @ p["w2"] + p["b2"], 0.0)
        return h @ p["w3"] + p["b3"]

    fwd = jax.jit(threshold_encoder_forward, static_argnames=("block_b",))

    # --- exact path (f32 matmul weights), tiny batch ---
    prepped_f32 = prepare_params(params, matmul_dtype=jnp.float32)
    threshold = jax.random.uniform(xkey, (2, input_dim), jnp.float32)
    out = jax.block_until_ready(fwd(threshold, prepped_f32))
    ref = ref_fn(threshold, params)
    assert out.shape == (2, output_dim)
    assert jnp.allclose(out, ref, atol=1e-5, rtol=1e-5)

    # --- default fast path (bf16 matmul weights), multi-tile batch ---
    prepped = prepare_params(params)           # bf16 weights, device-tuned pack
    thr_big = jax.random.uniform(jax.random.PRNGKey(1), (300,), jnp.float32)
    out_big = jax.block_until_ready(fwd(thr_big, prepped))
    ref_big = ref_fn(thr_big[:, None], params)
    assert out_big.shape == (300, output_dim)
    assert jnp.allclose(out_big, ref_big, atol=3e-2, rtol=3e-2)

    # --- batch not divisible by the pack factor (exercises tail slice) ---
    thr_odd = jax.random.uniform(jax.random.PRNGKey(2), (13, input_dim), jnp.float32)
    out_odd = jax.block_until_ready(fwd(thr_odd, prepped))
    ref_odd = ref_fn(thr_odd, params)
    assert out_odd.shape == (13, output_dim)
    assert jnp.allclose(out_odd, ref_odd, atol=3e-2, rtol=3e-2)

    print("KERNEL_OK")
</pallas_src>

<mosaic_0001>
module attributes {stable_mosaic.version = 11 : i64} {
  func.func @_mlp_kernel(%arg0: i32, %arg1: memref<8x4xf32, #tpu.memory_space<vmem>>, %arg2: memref<5x256xf32, #tpu.memory_space<vmem>>, %arg3: memref<256x256xf32, #tpu.memory_space<vmem>>, %arg4: memref<256x256xf32, #tpu.memory_space<vmem>>, %arg5: memref<2x256xf32, #tpu.memory_space<vmem>>, %arg6: memref<8x256xf32, #tpu.memory_space<vmem>>) attributes {dimension_semantics = [#tpu.dimension_semantics<parallel>], iteration_bounds = array<i64: 1>, scalar_prefetch = 0 : i64, scratch_operands = 0 : i64, tpu.core_type = #tpu.core_type<tc>, window_params = [{transform_indices = @transform_0, window_bounds = array<i64: 8, 4>}, {pipeline_mode = #tpu.pipeline_mode<synchronous>, transform_indices = @transform_1, window_bounds = array<i64: 5, 256>}, {pipeline_mode = #tpu.pipeline_mode<synchronous>, transform_indices = @transform_2, window_bounds = array<i64: 256, 256>}, {pipeline_mode = #tpu.pipeline_mode<synchronous>, transform_indices = @transform_3, window_bounds = array<i64: 256, 256>}, {pipeline_mode = #tpu.pipeline_mode<synchronous>, transform_indices = @transform_4, window_bounds = array<i64: 2, 256>}, {transform_indices = @transform_5, window_bounds = array<i64: 8, 256>}]} {
    %c0 = arith.constant 0 : index
    %c0_0 = arith.constant 0 : index
    %0 = vector.load %arg1[%c0, %c0_0] : memref<8x4xf32, #tpu.memory_space<vmem>>, vector<8x4xf32>
    %c4 = arith.constant 4 : index
    %c0_1 = arith.constant 0 : index
    %1 = vector.load %arg2[%c4, %c0_1] : memref<5x256xf32, #tpu.memory_space<vmem>>, vector<1x256xf32>
    %2 = vector.extract_strided_slice %0 {offsets = [0, 0], sizes = [8, 1], strides = [1, 1]} : vector<8x4xf32> to vector<8x1xf32>
    %c0_2 = arith.constant 0 : index
    %c0_3 = arith.constant 0 : index
    %3 = vector.load %arg2[%c0_2, %c0_3] : memref<5x256xf32, #tpu.memory_space<vmem>>, vector<1x256xf32>
    %4 = vector.broadcast %2 : vector<8x1xf32> to vector<8x256xf32>
    %5 = vector.broadcast %3 : vector<1x256xf32> to vector<8x256xf32>
    %6 = arith.mulf %4, %5 : vector<8x256xf32>
    %7 = vector.broadcast %1 : vector<1x256xf32> to vector<8x256xf32>
    %8 = arith.addf %7, %6 : vector<8x256xf32>
    %9 = vector.extract_strided_slice %0 {offsets = [0, 1], sizes = [8, 1], strides = [1, 1]} : vector<8x4xf32> to vector<8x1xf32>
    %c1 = arith.constant 1 : index
    %c0_4 = arith.constant 0 : index
    %10 = vector.load %arg2[%c1, %c0_4] : memref<5x256xf32, #tpu.memory_space<vmem>>, vector<1x256xf32>
    %11 = vector.broadcast %9 : vector<8x1xf32> to vector<8x256xf32>
    %12 = vector.broadcast %10 : vector<1x256xf32> to vector<8x256xf32>
    %13 = arith.mulf %11, %12 : vector<8x256xf32>
    %14 = arith.addf %8, %13 : vector<8x256xf32>
    %15 = vector.extract_strided_slice %0 {offsets = [0, 2], sizes = [8, 1], strides = [1, 1]} : vector<8x4xf32> to vector<8x1xf32>
    %c2 = arith.constant 2 : index
    %c0_5 = arith.constant 0 : index
    %16 = vector.load %arg2[%c2, %c0_5] : memref<5x256xf32, #tpu.memory_space<vmem>>, vector<1x256xf32>
    %17 = vector.broadcast %15 : vector<8x1xf32> to vector<8x256xf32>
    %18 = vector.broadcast %16 : vector<1x256xf32> to vector<8x256xf32>
    %19 = arith.mulf %17, %18 : vector<8x256xf32>
    %20 = arith.addf %14, %19 : vector<8x256xf32>
    %21 = vector.extract_strided_slice %0 {offsets = [0, 3], sizes = [8, 1], strides = [1, 1]} : vector<8x4xf32> to vector<8x1xf32>
    %c3 = arith.constant 3 : index
    %c0_6 = arith.constant 0 : index
    %22 = vector.load %arg2[%c3, %c0_6] : memref<5x256xf32, #tpu.memory_space<vmem>>, vector<1x256xf32>
    %23 = vector.broadcast %21 : vector<8x1xf32> to vector<8x256xf32>
    %24 = vector.broadcast %22 : vector<1x256xf32> to vector<8x256xf32>
    %25 = arith.mulf %23, %24 : vector<8x256xf32>
    %26 = arith.addf %20, %25 : vector<8x256xf32>
    %cst = arith.constant 0.000000e+00 : f32
    %27 = vector.broadcast %cst : f32 to vector<8x256xf32>
    %28 = arith.maximumf %26, %27 : vector<8x256xf32>
    %c0_7 = arith.constant 0 : index
    %c0_8 = arith.constant 0 : index
    %29 = vector.load %arg3[%c0_7, %c0_8] : memref<256x256xf32, #tpu.memory_space<vmem>>, vector<256x256xf32>
    %cst_9 = arith.constant dense<0.000000e+00> : vector<8x256xf32>
    %30 = tpu.matmul %28, %29, %cst_9 {dimension_numbers = #tpu.dot_dimension_numbers<[1], [0], [0], [1], [0, 0, 1, 1], [], []>} : vector<8x256xf32>, vector<256x256xf32>, vector<8x256xf32> -> vector<8x256xf32>
    %c0_10 = arith.constant 0 : index
    %c0_11 = arith.constant 0 : index
    %31 = vector.load %arg5[%c0_10, %c0_11] : memref<2x256xf32, #tpu.memory_space<vmem>>, vector<1x256xf32>
    %32 = vector.broadcast %31 : vector<1x256xf32> to vector<8x256xf32>
    %33 = arith.addf %30, %32 : vector<8x256xf32>
    %cst_12 = arith.constant 0.000000e+00 : f32
    %34 = vector.broadcast %cst_12 : f32 to vector<8x256xf32>
    %35 = arith.maximumf %33, %34 : vector<8x256xf32>
    %c0_13 = arith.constant 0 : index
    %c0_14 = arith.constant 0 : index
    %36 = vector.load %arg4[%c0_13, %c0_14] : memref<256x256xf32, #tpu.memory_space<vmem>>, vector<256x256xf32>
    %cst_15 = arith.constant dense<0.000000e+00> : vector<8x256xf32>
    %37 = tpu.matmul %35, %36, %cst_15 {dimension_numbers = #tpu.dot_dimension_numbers<[1], [0], [0], [1], [0, 0, 1, 1], [], []>} : vector<8x256xf32>, vector<256x256xf32>, vector<8x256xf32> -> vector<8x256xf32>
    %c1_16 = arith.constant 1 : index
    %c0_17 = arith.constant 0 : index
    %38 = vector.load %arg5[%c1_16, %c0_17] : memref<2x256xf32, #tpu.memory_space<vmem>>, vector<1x256xf32>
    %39 = vector.broadcast %38 : vector<1x256xf32> to vector<8x256xf32>
    %40 = arith.addf %37, %39 : vector<8x256xf32>
    %c0_18 = arith.constant 0 : index
    %c0_19 = arith.constant 0 : index
    %41 = vector.load %arg6[%c0_18, %c0_19] : memref<8x256xf32, #tpu.memory_space<vmem>>, vector<8x256xf32>
    tpu.vector_store %arg6[%c0_18, %c0_19], %40 {strides = array<i32>} : memref<8x256xf32, #tpu.memory_space<vmem>>, vector<8x256xf32>,
    return
  }
  func.func @transform_0(%arg0: i32) -> (i32, i32) {
    %c0_i32 = arith.constant 0 : i32
    %c0_i32_0 = arith.constant 0 : i32
    return %arg0, %c0_i32 : i32, i32
  }
  func.func @transform_1(%arg0: i32) -> (i32, i32) {
    %c0_i32 = arith.constant 0 : i32
    %c0_i32_0 = arith.constant 0 : i32
    %c0_i32_1 = arith.constant 0 : i32
    return %c0_i32, %c0_i32_0 : i32, i32
  }
  func.func @transform_2(%arg0: i32) -> (i32, i32) {
    %c0_i32 = arith.constant 0 : i32
    %c0_i32_0 = arith.constant 0 : i32
    %c0_i32_1 = arith.constant 0 : i32
    return %c0_i32, %c0_i32_0 : i32, i32
  }
  func.func @transform_3(%arg0: i32) -> (i32, i32) {
    %c0_i32 = arith.constant 0 : i32
    %c0_i32_0 = arith.constant 0 : i32
    %c0_i32_1 = arith.constant 0 : i32
    return %c0_i32, %c0_i32_0 : i32, i32
  }
  func.func @transform_4(%arg0: i32) -> (i32, i32) {
    %c0_i32 = arith.constant 0 : i32
    %c0_i32_0 = arith.constant 0 : i32
    %c0_i32_1 = arith.constant 0 : i32
    return %c0_i32, %c0_i32_0 : i32, i32
  }
  func.func @transform_5(%arg0: i32) -> (i32, i32) {
    %c0_i32 = arith.constant 0 : i32
    %c0_i32_0 = arith.constant 0 : i32
    return %arg0, %c0_i32 : i32, i32
  }
}

</mosaic_0001>

<llo_original>
// kernel: threshold_encoder_forward.1
$region0: #{threshold_encoder_forward.1}
  #allocation0 [shape = 'u32[]', space=smem, size = 0x4, offset = 0x4, fixed_abs, tag = 'smem constant byte address 0x4 - core index']
  #allocation1 [shape = 'u32[144,128]{1,0:T(1,128)}', space=vmem, size = 0x12000, scoped, tag = 'internal scratch']
  %s0 = inlined_call_operand.vmem [shape: f32[8,4], index: 0, kind: input, shape index: {}]
  %s1 = inlined_call_operand.hbm [shape: f32[5,256], index: 1, kind: input, shape index: {}]
  %s2 = inlined_call_operand.hbm [shape: f32[256,256], index: 2, kind: input, shape index: {}]
  %s3 = inlined_call_operand.hbm [shape: f32[256,256], index: 3, kind: input, shape index: {}]
  %s4 = inlined_call_operand.vmem [shape: f32[2,256], index: 4, kind: input, shape index: {}]
  %s5 = inlined_call_operand.vmem [shape: f32[1,256], index: 5, kind: output, shape index: {}]
  %s6 = sld [smem:[#allocation0]]
  $region72: #{threshold_encoder_forward.1} parent=0
    _
  %s8 = ssub.s32 1, %s6
  %s9 = scalar_select 0, %s8, %s6
  $region1: #{threshold_encoder_forward.1} parent=0
    #allocation2 [shape = 'u8[8192]{0}', space=vmem, size = 0x2000, scoped, tag = 'input window, operand 1, single buffered']
    #allocation3 [shape = 's32[1]{0}', space=sflag, size = 0x4, scoped, tag = 'scoped memory for threshold_encoder_forward.1']
    #allocation4 [shape = 'u8[262144]{0}', space=vmem, size = 0x40000, scoped, tag = 'input window, operand 2, single buffered']
    #allocation5 [shape = 's32[1]{0}', space=sflag, size = 0x4, scoped, tag = 'scoped memory for threshold_encoder_forward.1']
    #allocation6 [shape = 'u8[262144]{0}', space=vmem, size = 0x40000, scoped, tag = 'input window, operand 3, single buffered']
    #allocation7 [shape = 'u8[8192]{0}', space=vmem, size = 0x2000, scoped, tag = 'output window, operand 0, single buffered']
    %10 = vsyncpa [#allocation3], 0
    %11 = vsyncpa [#allocation5], 0
    // Predicated region
    $region2: #{threshold_encoder_forward.1} parent=1 // pred_check
      _
    $region3: #{threshold_encoder_forward.1} parent=1 // pred_check_branch
      %13 = sbr.rel (0) target = $region5
    $region4: #{threshold_encoder_forward.1} parent=1 // pred_region
      _
    $region5: #{threshold_encoder_forward.1} parent=1 // pred_fallthru
      _
    // Predicated region
    $region6: #{threshold_encoder_forward.1} parent=1 // pred_check
      _
    $region7: #{threshold_encoder_forward.1} parent=1 // pred_check_branch
      %15 = sbr.rel (0) target = $region9
    $region8: #{threshold_encoder_forward.1} parent=1 // pred_region
      %s17 = ssub.s32 256, 256
      %18 = vsyncadd [#allocation3], %s17
      %s20 = sshll.u32 [#allocation2], 4
      %s21 = int_to_ptr.vmem [resolvable:$true] %s20
      %23 = dma.hbm_to_vmem [thread:$0]  %s1, 256, %s21, [#allocation3]
    $region9: #{threshold_encoder_forward.1} parent=1 // pred_fallthru
      _
    // Predicated region
    $region10: #{threshold_encoder_forward.1} parent=1 // pred_check
      _
    $region11: #{threshold_encoder_forward.1} parent=1 // pred_check_branch
      %25 = sbr.rel (0) target = $region13
    $region12: #{threshold_encoder_forward.1} parent=1 // pred_region
      %s27 = ssub.s32 8192, 8192
      %28 = vsyncadd [#allocation5], %s27
      %s29 = sshll.u32 [#allocation4], 4
      %s30 = int_to_ptr.vmem [resolvable:$true] %s29
      %35 = dma.hbm_to_vmem [thread:$0]  %s2, 8192, %s30, [#allocation5], 256, 256, 16
    $region13: #{threshold_encoder_forward.1} parent=1 // pred_fallthru
      _
    // Predicated region
    $region14: #{threshold_encoder_forward.1} parent=1 // pred_check
      _
    $region15: #{threshold_encoder_forward.1} parent=1 // pred_check_branch
      %37 = sbr.rel (0) target = $region17
    $region16: #{threshold_encoder_forward.1} parent=1 // pred_region
      %s39 = ssub.s32 8192, 8192
      %40 = vsyncadd [#allocation5], %s39
      %s41 = sshll.u32 [#allocation6], 4
      %s42 = int_to_ptr.vmem [resolvable:$true] %s41
      %47 = dma.hbm_to_vmem [thread:$0]  %s3, 8192, %s42, [#allocation5], 256, 256, 16
    $region17: #{threshold_encoder_forward.1} parent=1 // pred_fallthru
      _
    // Predicated region
    $region18: #{threshold_encoder_forward.1} parent=1 // pred_check
      _
    $region19: #{threshold_encoder_forward.1} parent=1 // pred_check_branch
      %49 = sbr.rel (0) target = $region21
    $region20: #{threshold_encoder_forward.1} parent=1 // pred_region
      _
    $region21: #{threshold_encoder_forward.1} parent=1 // pred_fallthru
      _
    // Predicated region
    $region22: #{threshold_encoder_forward.1} parent=1 // pred_check
      _
    $region23: #{threshold_encoder_forward.1} parent=1 // pred_check_branch
      %51 = sbr.rel (0) target = $region25
    $region24: #{threshold_encoder_forward.1} parent=1 // pred_region
      %52 = dma.done [#allocation3], 256
    $region25: #{threshold_encoder_forward.1} parent=1 // pred_fallthru
      _
    // Predicated region
    $region26: #{threshold_encoder_forward.1} parent=1 // pred_check
      _
    $region27: #{threshold_encoder_forward.1} parent=1 // pred_check_branch
      %54 = sbr.rel (0) target = $region29
    $region28: #{threshold_encoder_forward.1} parent=1 // pred_region
      %55 = dma.done [#allocation5], 8192
    $region29: #{threshold_encoder_forward.1} parent=1 // pred_fallthru
      _
    // Predicated region
    $region30: #{threshold_encoder_forward.1} parent=1 // pred_check
      _
    $region31: #{threshold_encoder_forward.1} parent=1 // pred_check_branch
      %57 = sbr.rel (0) target = $region33
    $region32: #{threshold_encoder_forward.1} parent=1 // pred_region
      %58 = dma.done [#allocation5], 8192
    $region33: #{threshold_encoder_forward.1} parent=1 // pred_fallthru
      _
    %v59 = vld [vmem:[%s0] sm:$0xff]
    %s60 = scalar_lea.vmem [#allocation2], 4
    %v61 = vld [vmem:[%s60] ss:$8 sm:$0x3]
    %v62 = vld [vmem:[#allocation2] ss:$8 sm:$0x3]
    %64 = vset.pattern.permute.xlu0 0
    %65 = vperm.xlu0 %64, %v59
    %v66 = vpop.permute.xlu0 %65
    %v69 = vlaneseq
    %v70 = vshrl.u32 %v69, 7
    %v71 = vsub.s32 0, %v70
    %v72 = vrot.slane %v62, %v71
    %v73 = vlaneseq
    %v74 = vshrl.u32 %v73, 7
    %v75 = vsub.s32 1, %v74
    %v76 = vrot.slane %v62, %v75
    %v79 = vmul.f32 %v66, %v72
    %v80 = vmul.f32 %v66, %v76
    %v82 = vlaneseq
    %v83 = vshrl.u32 %v82, 7
    %v84 = vsub.s32 0, %v83
    %v85 = vrot.slane %v61, %v84
    %v86 = vlaneseq
    %v87 = vshrl.u32 %v86, 7
    %v88 = vsub.s32 1, %v87
    %v89 = vrot.slane %v61, %v88
    %v92 = vadd.f32 %v85, %v79
    %v93 = vadd.f32 %v89, %v80
    %s94 = scalar_lea.vmem [#allocation2], 1
    %v95 = vld [vmem:[%s94] ss:$8 sm:$0x3]
    %96 = vset.pattern.permute.xlu0 1
    %97 = vperm.xlu0 %96, %v59
    %v98 = vpop.permute.xlu0 %97
    %v101 = vlaneseq
    %v102 = vshrl.u32 %v101, 7
    %v103 = vsub.s32 0, %v102
    %v104 = vrot.slane %v95, %v103
    %v105 = vlaneseq
    %v106 = vshrl.u32 %v105, 7
    %v107 = vsub.s32 1, %v106
    %v108 = vrot.slane %v95, %v107
    %v111 = vmul.f32 %v98, %v104
    %v112 = vmul.f32 %v98, %v108
    %v113 = vadd.f32 %v92, %v111
    %v114 = vadd.f32 %v93, %v112
    %s115 = scalar_lea.vmem [#allocation2], 2
    %v116 = vld [vmem:[%s115] ss:$8 sm:$0x3]
    %117 = vset.pattern.permute.xlu0 2
    %118 = vperm.xlu0 %117, %v59
    %v119 = vpop.permute.xlu0 %118
    %v122 = vlaneseq
    %v123 = vshrl.u32 %v122, 7
    %v124 = vsub.s32 0, %v123
    %v125 = vrot.slane %v116, %v124
    %v126 = vlaneseq
    %v127 = vshrl.u32 %v126, 7
    %v128 = vsub.s32 1, %v127
    %v129 = vrot.slane %v116, %v128
    %v132 = vmul.f32 %v119, %v125
    %v133 = vmul.f32 %v119, %v129
    %v134 = vadd.f32 %v113, %v132
    %v135 = vadd.f32 %v114, %v133
    %s136 = scalar_lea.vmem [#allocation2], 3
    %v137 = vld [vmem:[%s136] ss:$8 sm:$0x3]
    %138 = vset.pattern.permute.xlu0 3
    %139 = vperm.xlu0 %138, %v59
    %v140 = vpop.permute.xlu0 %139
    %v143 = vlaneseq
    %v144 = vshrl.u32 %v143, 7
    %v145 = vsub.s32 0, %v144
    %v146 = vrot.slane %v137, %v145
    %v147 = vlaneseq
    %v148 = vshrl.u32 %v147, 7
    %v149 = vsub.s32 1, %v148
    %v150 = vrot.slane %v137, %v149
    %v153 = vmul.f32 %v140, %v146
    %v154 = vmul.f32 %v140, %v150
    %v155 = vadd.f32 %v134, %v153
    %v156 = vadd.f32 %v135, %v154
    %v157 = vmax.f32 %v155, 0.0
    %v158 = vmax.f32 %v156, 0.0
    %v159 = vld [vmem:[#allocation4] sm:$0xff]
    %v160 = vld [vmem:[#allocation4 + $0x8] sm:$0xff]
    %v161 = vld [vmem:[#allocation4 + $0x10] sm:$0xff]
    %v162 = vld [vmem:[#allocation4 + $0x18] sm:$0xff]
    %v163 = vld [vmem:[#allocation4 + $0x20] sm:$0xff]
    %v164 = vld [vmem:[#allocation4 + $0x28] sm:$0xff]
    %v165 = vld [vmem:[#allocation4 + $0x30] sm:$0xff]
    %v166 = vld [vmem:[#allocation4 + $0x38] sm:$0xff]
    %v167 = vld [vmem:[#allocation4 + $0x40] sm:$0xff]
    %v168 = vld [vmem:[#allocation4 + $0x48] sm:$0xff]
    %v169 = vld [vmem:[#allocation4 + $0x50] sm:$0xff]
    %v170 = vld [vmem:[#allocation4 + $0x58] sm:$0xff]
    %v171 = vld [vmem:[#allocation4 + $0x60] sm:$0xff]
    %v172 = vld [vmem:[#allocation4 + $0x68] sm:$0xff]
    %v173 = vld [vmem:[#allocation4 + $0x70] sm:$0xff]
    %v174 = vld [vmem:[#allocation4 + $0x78] sm:$0xff]
    %v175 = vld [vmem:[#allocation4 + $0x80] sm:$0xff]
    %v176 = vld [vmem:[#allocation4 + $0x88] sm:$0xff]
    %v177 = vld [vmem:[#allocation4 + $0x90] sm:$0xff]
    %v178 = vld [vmem:[#allocation4 + $0x98] sm:$0xff]
    %v179 = vld [vmem:[#allocation4 + $0xa0] sm:$0xff]
    %v180 = vld [vmem:[#allocation4 + $0xa8] sm:$0xff]
    %v181 = vld [vmem:[#allocation4 + $0xb0] sm:$0xff]
    %v182 = vld [vmem:[#allocation4 + $0xb8] sm:$0xff]
    %v183 = vld [vmem:[#allocation4 + $0xc0] sm:$0xff]
    %v184 = vld [vmem:[#allocation4 + $0xc8] sm:$0xff]
    %v185 = vld [vmem:[#allocation4 + $0xd0] sm:$0xff]
    %v186 = vld [vmem:[#allocation4 + $0xd8] sm:$0xff]
    %v187 = vld [vmem:[#allocation4 + $0xe0] sm:$0xff]
    %v188 = vld [vmem:[#allocation4 + $0xe8] sm:$0xff]
    %v189 = vld [vmem:[#allocation4 + $0xf0] sm:$0xff]
    %v190 = vld [vmem:[#allocation4 + $0xf8] sm:$0xff]
    %v191 = vld [vmem:[#allocation4 + $0x100] sm:$0xff]
    %v192 = vld [vmem:[#allocation4 + $0x108] sm:$0xff]
    %v193 = vld [vmem:[#allocation4 + $0x110] sm:$0xff]
    %v194 = vld [vmem:[#allocation4 + $0x118] sm:$0xff]
    %v195 = vld [vmem:[#allocation4 + $0x120] sm:$0xff]
    %v196 = vld [vmem:[#allocation4 + $0x128] sm:$0xff]
    %v197 = vld [vmem:[#allocation4 + $0x130] sm:$0xff]
    %v198 = vld [vmem:[#allocation4 + $0x138] sm:$0xff]
    %v199 = vld [vmem:[#allocation4 + $0x140] sm:$0xff]
    %v200 = vld [vmem:[#allocation4 + $0x148] sm:$0xff]
    %v201 = vld [vmem:[#allocation4 + $0x150] sm:$0xff]
    %v202 = vld [vmem:[#allocation4 + $0x158] sm:$0xff]
    %v203 = vld [vmem:[#allocation4 + $0x160] sm:$0xff]
    %v204 = vld [vmem:[#allocation4 + $0x168] sm:$0xff]
    %v205 = vld [vmem:[#allocation4 + $0x170] sm:$0xff]
    %v206 = vld [vmem:[#allocation4 + $0x178] sm:$0xff]
    %v207 = vld [vmem:[#allocation4 + $0x180] sm:$0xff]
    %v208 = vld [vmem:[#allocation4 + $0x188] sm:$0xff]
    %v209 = vld [vmem:[#allocation4 + $0x190] sm:$0xff]
    %v210 = vld [vmem:[#allocation4 + $0x198] sm:$0xff]
    %v211 = vld [vmem:[#allocation4 + $0x1a0] sm:$0xff]
    %v212 = vld [vmem:[#allocation4 + $0x1a8] sm:$0xff]
    %v213 = vld [vmem:[#allocation4 + $0x1b0] sm:$0xff]
    %v214 = vld [vmem:[#allocation4 + $0x1b8] sm:$0xff]
    %v215 = vld [vmem:[#allocation4 + $0x1c0] sm:$0xff]
    %v216 = vld [vmem:[#allocation4 + $0x1c8] sm:$0xff]
    %v217 = vld [vmem:[#allocation4 + $0x1d0] sm:$0xff]
    %v218 = vld [vmem:[#allocation4 + $0x1d8] sm:$0xff]
    %v219 = vld [vmem:[#allocation4 + $0x1e0] sm:$0xff]
    %v220 = vld [vmem:[#allocation4 + $0x1e8] sm:$0xff]
    %v221 = vld [vmem:[#allocation4 + $0x1f0] sm:$0xff]
    %v222 = vld [vmem:[#allocation4 + $0x1f8] sm:$0xff]
    %v223 = vld [vmem:[%s4] ss:$2 sm:$0x3]
    %v225 = vlaneseq
    %v226 = vshrl.u32 %v225, 7
    %v227 = vsub.s32 0, %v226
    %v228 = vrot.slane %v223, %v227
    %v229 = vlaneseq
    %v230 = vshrl.u32 %v229, 7
    %v231 = vsub.s32 1, %v230
    %v232 = vrot.slane %v223, %v231
    %235 = vmatprep.subr.mxu0 %v190
    %236 = vmatpush1.msra.mxu0 %v189
    %237 = vmatprep.subr.mxu0 %v188
    %238 = vmatpush1.msra.mxu0 %v187
    %239 = vmatprep.subr.mxu0 %v186
    %240 = vmatpush1.msra.mxu0 %v185
    %241 = vmatprep.subr.mxu0 %v184
    %242 = vmatpush1.msra.mxu0 %v183
    %243 = vmatprep.subr.mxu0 %v182
    %244 = vmatpush1.msra.mxu0 %v181
    %245 = vmatprep.subr.mxu0 %v180
    %246 = vmatpush1.msra.mxu0 %v179
    %247 = vmatprep.subr.mxu0 %v178
    %248 = vmatpush1.msra.mxu0 %v177
    %249 = vmatprep.subr.mxu0 %v176
    %250 = vmatpush1.msra.mxu0 %v175
    %251 = vmatprep.subr.mxu0 %v174
    %252 = vmatpush1.msra.mxu0 %v173
    %253 = vmatprep.subr.mxu0 %v172
    %254 = vmatpush1.msra.mxu0 %v171
    %255 = vmatprep.subr.mxu0 %v170
    %256 = vmatpush1.msra.mxu0 %v169
    %257 = vmatprep.subr.mxu0 %v168
    %258 = vmatpush1.msra.mxu0 %v167
    %259 = vmatprep.subr.mxu0 %v166
    %260 = vmatpush1.msra.mxu0 %v165
    %261 = vmatprep.subr.mxu0 %v164
    %262 = vmatpush1.msra.mxu0 %v163
    %263 = vmatprep.subr.mxu0 %v162
    %264 = vmatpush1.msra.mxu0 %v161
    %265 = vmatprep.subr.mxu0 %v160
    %266 = vmatpush1.msra.mxu0 %v159
    %267 = vmatprep.subr.mxu0 %v222
    %268 = vmatpush2.msra.mxu0 %v221
    %269 = vmatprep.subr.mxu0 %v220
    %270 = vmatpush2.msra.mxu0 %v219
    %271 = vmatprep.subr.mxu0 %v218
    %272 = vmatpush2.msra.mxu0 %v217
    %273 = vmatprep.subr.mxu0 %v216
    %274 = vmatpush2.msra.mxu0 %v215
    %275 = vmatprep.subr.mxu0 %v214
    %276 = vmatpush2.msra.mxu0 %v213
    %277 = vmatprep.subr.mxu0 %v212
    %278 = vmatpush2.msra.mxu0 %v211
    %279 = vmatprep.subr.mxu0 %v210
    %280 = vmatpush2.msra.mxu0 %v209
    %281 = vmatprep.subr.mxu0 %v208
    %282 = vmatpush2.msra.mxu0 %v207
    %283 = vmatprep.subr.mxu0 %v206
    %284 = vmatpush2.msra.mxu0 %v205
    %285 = vmatprep.subr.mxu0 %v204
    %286 = vmatpush2.msra.mxu0 %v203
    %287 = vmatprep.subr.mxu0 %v202
    %288 = vmatpush2.msra.mxu0 %v201
    %289 = vmatprep.subr.mxu0 %v200
    %290 = vmatpush2.msra.mxu0 %v199
    %291 = vmatprep.subr.mxu0 %v198
    %292 = vmatpush2.msra.mxu0 %v197
    %293 = vmatprep.subr.mxu0 %v196
    %294 = vmatpush2.msra.mxu0 %v195
    %295 = vmatprep.subr.mxu0 %v194
    %296 = vmatpush2.msra.mxu0 %v193
    %297 = vmatprep.subr.mxu0 %v192
    %298 = vmatpush2.msra.mxu0 %v191
    %299 = vmatprep.mubr.f32.mxu0 %v158
    %300 = vmatmul.mubr.f32.gmra.mxu0 %v157
    %v301 = vpop.f32.mrf.mxu0
    %v302 = vadd.f32 %v228, %v301
    %v303 = vpop.f32.mrf.mxu0
    %v304 = vadd.f32 %v232, %v303
    %305 = vdwg.mxu0
    %v306 = vmax.f32 %v302, 0.0
    %v307 = vmax.f32 %v304, 0.0
    %v308 = vld [vmem:[#allocation6] sm:$0xff]
    %v309 = vld [vmem:[#allocation6 + $0x8] sm:$0xff]
    %v310 = vld [vmem:[#allocation6 + $0x10] sm:$0xff]
    %v311 = vld [vmem:[#allocation6 + $0x18] sm:$0xff]
    %v312 = vld [vmem:[#allocation6 + $0x20] sm:$0xff]
    %v313 = vld [vmem:[#allocation6 + $0x28] sm:$0xff]
    %v314 = vld [vmem:[#allocation6 + $0x30] sm:$0xff]
    %v315 = vld [vmem:[#allocation6 + $0x38] sm:$0xff]
    %v316 = vld [vmem:[#allocation6 + $0x40] sm:$0xff]
    %v317 = vld [vmem:[#allocation6 + $0x48] sm:$0xff]
    %v318 = vld [vmem:[#allocation6 + $0x50] sm:$0xff]
    %v319 = vld [vmem:[#allocation6 + $0x58] sm:$0xff]
    %v320 = vld [vmem:[#allocation6 + $0x60] sm:$0xff]
    %v321 = vld [vmem:[#allocation6 + $0x68] sm:$0xff]
    %v322 = vld [vmem:[#allocation6 + $0x70] sm:$0xff]
    %v323 = vld [vmem:[#allocation6 + $0x78] sm:$0xff]
    %v324 = vld [vmem:[#allocation6 + $0x80] sm:$0xff]
    %v325 = vld [vmem:[#allocation6 + $0x88] sm:$0xff]
    %v326 = vld [vmem:[#allocation6 + $0x90] sm:$0xff]
    %v327 = vld [vmem:[#allocation6 + $0x98] sm:$0xff]
    %v328 = vld [vmem:[#allocation6 + $0xa0] sm:$0xff]
    %v329 = vld [vmem:[#allocation6 + $0xa8] sm:$0xff]
    %v330 = vld [vmem:[#allocation6 + $0xb0] sm:$0xff]
    %v331 = vld [vmem:[#allocation6 + $0xb8] sm:$0xff]
    %v332 = vld [vmem:[#allocation6 + $0xc0] sm:$0xff]
    %v333 = vld [vmem:[#allocation6 + $0xc8] sm:$0xff]
    %v334 = vld [vmem:[#allocation6 + $0xd0] sm:$0xff]
    %v335 = vld [vmem:[#allocation6 + $0xd8] sm:$0xff]
    %v336 = vld [vmem:[#allocation6 + $0xe0] sm:$0xff]
    %v337 = vld [vmem:[#allocation6 + $0xe8] sm:$0xff]
    %v338 = vld [vmem:[#allocation6 + $0xf0] sm:$0xff]
    %v339 = vld [vmem:[#allocation6 + $0xf8] sm:$0xff]
    %v340 = vld [vmem:[#allocation6 + $0x100] sm:$0xff]
    %v341 = vld [vmem:[#allocation6 + $0x108] sm:$0xff]
    %v342 = vld [vmem:[#allocation6 + $0x110] sm:$0xff]
    %v343 = vld [vmem:[#allocation6 + $0x118] sm:$0xff]
    %v344 = vld [vmem:[#allocation6 + $0x120] sm:$0xff]
    %v345 = vld [vmem:[#allocation6 + $0x128] sm:$0xff]
    %v346 = vld [vmem:[#allocation6 + $0x130] sm:$0xff]
    %v347 = vld [vmem:[#allocation6 + $0x138] sm:$0xff]
    %v348 = vld [vmem:[#allocation6 + $0x140] sm:$0xff]
    %v349 = vld [vmem:[#allocation6 + $0x148] sm:$0xff]
    %v350 = vld [vmem:[#allocation6 + $0x150] sm:$0xff]
    %v351 = vld [vmem:[#allocation6 + $0x158] sm:$0xff]
    %v352 = vld [vmem:[#allocation6 + $0x160] sm:$0xff]
    %v353 = vld [vmem:[#allocation6 + $0x168] sm:$0xff]
    %v354 = vld [vmem:[#allocation6 + $0x170] sm:$0xff]
    %v355 = vld [vmem:[#allocation6 + $0x178] sm:$0xff]
    %v356 = vld [vmem:[#allocation6 + $0x180] sm:$0xff]
    %v357 = vld [vmem:[#allocation6 + $0x188] sm:$0xff]
    %v358 = vld [vmem:[#allocation6 + $0x190] sm:$0xff]
    %v359 = vld [vmem:[#allocation6 + $0x198] sm:$0xff]
    %v360 = vld [vmem:[#allocation6 + $0x1a0] sm:$0xff]
    %v361 = vld [vmem:[#allocation6 + $0x1a8] sm:$0xff]
    %v362 = vld [vmem:[#allocation6 + $0x1b0] sm:$0xff]
    %v363 = vld [vmem:[#allocation6 + $0x1b8] sm:$0xff]
    %v364 = vld [vmem:[#allocation6 + $0x1c0] sm:$0xff]
    %v365 = vld [vmem:[#allocation6 + $0x1c8] sm:$0xff]
    %v366 = vld [vmem:[#allocation6 + $0x1d0] sm:$0xff]
    %v367 = vld [vmem:[#allocation6 + $0x1d8] sm:$0xff]
    %v368 = vld [vmem:[#allocation6 + $0x1e0] sm:$0xff]
    %v369 = vld [vmem:[#allocation6 + $0x1e8] sm:$0xff]
    %v370 = vld [vmem:[#allocation6 + $0x1f0] sm:$0xff]
    %v371 = vld [vmem:[#allocation6 + $0x1f8] sm:$0xff]
    %s372 = scalar_lea.vmem %s4, 1
    %v373 = vld [vmem:[%s372] ss:$2 sm:$0x3]
    %v375 = vlaneseq
    %v376 = vshrl.u32 %v375, 7
    %v377 = vsub.s32 0, %v376
    %v378 = vrot.slane %v373, %v377
    %v379 = vlaneseq
    %v380 = vshrl.u32 %v379, 7
    %v381 = vsub.s32 1, %v380
    %v382 = vrot.slane %v373, %v381
    %385 = vmatprep.subr.mxu0 %v339
    %386 = vmatpush1.msra.mxu0 %v338
    %387 = vmatprep.subr.mxu0 %v337
    %388 = vmatpush1.msra.mxu0 %v336
    %389 = vmatprep.subr.mxu0 %v335
    %390 = vmatpush1.msra.mxu0 %v334
    %391 = vmatprep.subr.mxu0 %v333
    %392 = vmatpush1.msra.mxu0 %v332
    %393 = vmatprep.subr.mxu0 %v331
    %394 = vmatpush1.msra.mxu0 %v330
    %395 = vmatprep.subr.mxu0 %v329
    %396 = vmatpush1.msra.mxu0 %v328
    %397 = vmatprep.subr.mxu0 %v327
    %398 = vmatpush1.msra.mxu0 %v326
    %399 = vmatprep.subr.mxu0 %v325
    %400 = vmatpush1.msra.mxu0 %v324
    %401 = vmatprep.subr.mxu0 %v323
    %402 = vmatpush1.msra.mxu0 %v322
    %403 = vmatprep.subr.mxu0 %v321
    %404 = vmatpush1.msra.mxu0 %v320
    %405 = vmatprep.subr.mxu0 %v319
    %406 = vmatpush1.msra.mxu0 %v318
    %407 = vmatprep.subr.mxu0 %v317
    %408 = vmatpush1.msra.mxu0 %v316
    %409 = vmatprep.subr.mxu0 %v315
    %410 = vmatpush1.msra.mxu0 %v314
    %411 = vmatprep.subr.mxu0 %v313
    %412 = vmatpush1.msra.mxu0 %v312
    %413 = vmatprep.subr.mxu0 %v311
    %414 = vmatpush1.msra.mxu0 %v310
    %415 = vmatprep.subr.mxu0 %v309
    %416 = vmatpush1.msra.mxu0 %v308
    %417 = vmatprep.subr.mxu0 %v371
    %418 = vmatpush2.msra.mxu0 %v370
    %419 = vmatprep.subr.mxu0 %v369
    %420 = vmatpush2.msra.mxu0 %v368
    %421 = vmatprep.subr.mxu0 %v367
    %422 = vmatpush2.msra.mxu0 %v366
    %423 = vmatprep.subr.mxu0 %v365
    %424 = vmatpush2.msra.mxu0 %v364
    %425 = vmatprep.subr.mxu0 %v363
    %426 = vmatpush2.msra.mxu0 %v362
    %427 = vmatprep.subr.mxu0 %v361
    %428 = vmatpush2.msra.mxu0 %v360
    %429 = vmatprep.subr.mxu0 %v359
    %430 = vmatpush2.msra.mxu0 %v358
    %431 = vmatprep.subr.mxu0 %v357
    %432 = vmatpush2.msra.mxu0 %v356
    %433 = vmatprep.subr.mxu0 %v355
    %434 = vmatpush2.msra.mxu0 %v354
    %435 = vmatprep.subr.mxu0 %v353
    %436 = vmatpush2.msra.mxu0 %v352
    %437 = vmatprep.subr.mxu0 %v351
    %438 = vmatpush2.msra.mxu0 %v350
    %439 = vmatprep.subr.mxu0 %v349
    %440 = vmatpush2.msra.mxu0 %v348
    %441 = vmatprep.subr.mxu0 %v347
    %442 = vmatpush2.msra.mxu0 %v346
    %443 = vmatprep.subr.mxu0 %v345
    %444 = vmatpush2.msra.mxu0 %v344
    %445 = vmatprep.subr.mxu0 %v343
    %446 = vmatpush2.msra.mxu0 %v342
    %447 = vmatprep.subr.mxu0 %v341
    %448 = vmatpush2.msra.mxu0 %v340
    %449 = vmatprep.mubr.f32.mxu0 %v307
    %450 = vmatmul.mubr.f32.gmra.mxu0 %v306
    %v451 = vpop.f32.mrf.mxu0
    %v452 = vadd.f32 %v378, %v451
    %v453 = vpop.f32.mrf.mxu0
    %v454 = vadd.f32 %v382, %v453
    %455 = vdwg.mxu0
    %v458 = vcombine.low %v452, %v454
    %v459 = vcombine.high %v452, %v454
    %v461 = vunpack.c.l.s4 1966171168
    %v462 = vunpack.c.0.s8 %v461
    %v463 = vlaneseq
    %v464 = vshrl.u32 %v463, 7
    %v465 = vsub.s32 %v462, %v464
    %v466 = vrot.slane %v458, %v465
    %v468 = vunpack.c.l.s4 1966171168
    %v469 = vunpack.c.0.s8 %v468
    %v470 = vlaneseq
    %v471 = vshrl.u32 %v470, 7
    %v472 = vsub.s32 %v469, %v471
    %v473 = vrot.slane %v459, %v472
    %v474 = vcombine.high %v466, %v466
    %v475 = vcombine.high %v473, %v473
    %v477 = vunpack.c.l.s4 1966171168
    %v478 = vunpack.c.0.s8 %v477
    %v479 = vlaneseq
    %v480 = vshrl.u32 %v479, 7
    %v481 = vsub.s32 %v478, %v480
    %v482 = vrot.slane %v466, %v481
    %v484 = vunpack.c.l.s4 1966171168
    %v485 = vunpack.c.0.s8 %v484
    %v486 = vlaneseq
    %v487 = vshrl.u32 %v486, 7
    %v488 = vsub.s32 %v485, %v487
    %v489 = vrot.slane %v473, %v488
    %v491 = vunpack.c.l.s4 1966171168
    %v492 = vunpack.c.0.s8 %v491
    %v493 = vlaneseq
    %v494 = vshrl.u32 %v493, 7
    %v495 = vsub.s32 %v492, %v494
    %v496 = vrot.slane %v474, %v495
    %v498 = vunpack.c.l.s4 1966171168
    %v499 = vunpack.c.0.s8 %v498
    %v500 = vlaneseq
    %v501 = vshrl.u32 %v500, 7
    %v502 = vsub.s32 %v499, %v501
    %v503 = vrot.slane %v475, %v502
    %v504 = vcombine.high %v482, %v482
    %v505 = vcombine.high %v489, %v489
    %v506 = vcombine.high %v496, %v496
    %v507 = vcombine.high %v503, %v503
    %v516 = vlaneseq
    %vm517 = vcmp.ge.s32.totalorder %v516, 0
    %vm518 = vcmp.lt.s32.totalorder %v516, 256
    %vm519 = vmand %vm517, %vm518
    %520 = vst.msk [vmem:[#allocation7] sm:$0x3] %vm519, %v482
    %521 = vst.msk [vmem:[#allocation7 + $0x2] sm:$0x3] %vm519, %v496
    %522 = vst.msk [vmem:[#allocation7 + $0x4] sm:$0x3] %vm519, %v504
    %523 = vst.msk [vmem:[#allocation7 + $0x6] sm:$0x3] %vm519, %v506
    %524 = vst.msk [vmem:[#allocation7 + $0x8] sm:$0x3] %vm519, %v489
    %525 = vst.msk [vmem:[#allocation7 + $0xa] sm:$0x3] %vm519, %v503
    %526 = vst.msk [vmem:[#allocation7 + $0xc] sm:$0x3] %vm519, %v505
    %527 = vst.msk [vmem:[#allocation7 + $0xe] sm:$0x3] %vm519, %v507
    // Predicated region
    $region34: #{threshold_encoder_forward.1} parent=1 // pred_check
      _
    $region35: #{threshold_encoder_forward.1} parent=1 // pred_check_branch
      %529 = sbr.rel (0) target = $region37
    $region36: #{threshold_encoder_forward.1} parent=1 // pred_region
      // Predicated region
      $region38: #{threshold_encoder_forward.1} parent=36 // pred_check
        _
      $region39: #{threshold_encoder_forward.1} parent=36 // pred_check_branch
        %531 = sbr.rel (0) target = $region41
      $region40: #{threshold_encoder_forward.1} parent=36 // pred_region
        // Predicated region
        $region42: #{threshold_encoder_forward.1} parent=40 // pred_check
          _
        $region43: #{threshold_encoder_forward.1} parent=40 // pred_check_branch
          %533 = sbr.rel target = $region45
        $region44: #{threshold_encoder_forward.1} parent=40 // pred_region
          // Predicated region
          $region57: #{threshold_encoder_forward.1} parent=44 // pred_check
            _
          $region58: #{threshold_encoder_forward.1} parent=44 // pred_check_branch
            %549 = sbr.rel (0) target = $region60
          $region59: #{threshold_encoder_forward.1} parent=44 // pred_region
            %s551 = ssub.s32 4, 1
            loop: start=0, step=1, limit=1
            $region61: #{threshold_encoder_forward.1} parent=59 // loop_pre_header
              _
            $region62: #{threshold_encoder_forward.1} parent=59 // loop_header
              %s553 = sphi 0, %s557
              %p554 = scmp.ge.s32.totalorder %s553, 1
              %s558 = sphi [#allocation7], [#allocation7]
              %s559 = sphi %s5, %s5
            $region63: #{threshold_encoder_forward.1} parent=59 // loop_header_branch
              %556 = sbr.rel (%p554) target = $region67
            $region64: #{threshold_encoder_forward.1} parent=59 // loop_body
              %v560 = vld [vmem:[%s558] sm:%s551]
              %561 = vst [vmem:[%s559] sm:%s551] %v560
            $region65: #{threshold_encoder_forward.1} parent=59 // loop_footer
              %s557 = sadd.s32 1, %s553
            $region66: #{threshold_encoder_forward.1} parent=59 // loop_footer_branch
              %552 = sbr.rel target = $region62
            $region67: #{threshold_encoder_forward.1} parent=59 // loop_exit
              _
          $region60: #{threshold_encoder_forward.1} parent=44 // pred_fallthru
            _
        $region45: #{threshold_encoder_forward.1} parent=40 // pred_fallthru
          _
        // Predicated region
        $region46: #{threshold_encoder_forward.1} parent=40 // pred_check
          _
        $region47: #{threshold_encoder_forward.1} parent=40 // pred_check_branch
          %535 = sbr.rel (0) target = $region49
        $region48: #{threshold_encoder_forward.1} parent=40 // pred_region
          %s537 = ssub.s32 4, 1
          loop: start=0, step=1, limit=1
          $region50: #{threshold_encoder_forward.1} parent=48 // loop_pre_header
            _
          $region51: #{threshold_encoder_forward.1} parent=48 // loop_header
            %s539 = sphi 0, %s543
            %p540 = scmp.ge.s32.totalorder %s539, 1
            %s544 = sphi [#allocation7], [#allocation7]
            %s545 = sphi %s5, %s5
          $region52: #{threshold_encoder_forward.1} parent=48 // loop_header_branch
            %542 = sbr.rel (%p540) target = $region56
          $region53: #{threshold_encoder_forward.1} parent=48 // loop_body
            %v546 = vld [vmem:[%s544] sm:%s537]
            %547 = vst [vmem:[%s545] sm:%s537] %v546
          $region54: #{threshold_encoder_forward.1} parent=48 // loop_footer
            %s543 = sadd.s32 1, %s539
          $region55: #{threshold_encoder_forward.1} parent=48 // loop_footer_branch
            %538 = sbr.rel target = $region51
          $region56: #{threshold_encoder_forward.1} parent=48 // loop_exit
            _
        $region49: #{threshold_encoder_forward.1} parent=40 // pred_fallthru
          _
      $region41: #{threshold_encoder_forward.1} parent=36 // pred_fallthru
        _
      %562 = vnop
    $region37: #{threshold_encoder_forward.1} parent=1 // pred_fallthru
      _
    // Predicated region
    $region68: #{threshold_encoder_forward.1} parent=1 // pred_check
      _
    $region69: #{threshold_encoder_forward.1} parent=1 // pred_check_branch
      %564 = sbr.rel (0) target = $region71
    $region70: #{threshold_encoder_forward.1} parent=1 // pred_region
      _
    $region71: #{threshold_encoder_forward.1} parent=1 // pred_fallthru
      _
    %565 = vsyncpa [#allocation3], 1
    %566 = vsyncpa [#allocation5], 1

</llo_original>
